<compile_context>
chip_gen: v5e
topology: v5e:2x2
jax: 0.10.0
libtpu: 0.0.40
codegen_flags: <defaults>
</compile_context>

<pallas_src>
from functools import partial

import jax
import jax.numpy as jnp
from jax.experimental import pallas as pl
from jax.experimental.pallas import tpu as pltpu


def _round_up(x, m):
    return (x + m - 1) // m * m


# ----------------------------------------------------------------------------- kernel
def _gal_linear_kernel(basis_ref,   # SMEM (2*deg,)            cos/sin basis values
                       wcoef_ref,   # VMEM (2*deg, in1, Np)    weight coeffs, K-major
                       bcoef_ref,   # VMEM (2*deg, 1,  Np)     bias coeffs
                       x_ref,       # VMEM (TB, in1)           batch tile (depth column kept)
                       o_ref,       # VMEM (TB, Np)            batch tile of outputs
                       *, two_deg, mxu_dtype):
    # Reconstruct the depth-dependent weight (K, N) and bias (1, N).
    # Per-step reconstruction (instead of reconstruct-once + scratch carry) keeps every
    # grid step independent, so the batch axis can be "parallel" (v7x megacore) with no
    # uninitialized per-core init flag.  Cost: 2*deg thin VPU FMAs per step, negligible
    # next to the x DMA / MXU work and overlapped with them.
    # The unrolled accumulation keeps the live set to one coefficient plane + one
    # accumulator (never materializes the full (2*deg, K, N) product).
    w_acc = basis_ref[0] * wcoef_ref[0]
    b_acc = basis_ref[0] * bcoef_ref[0]
    for k in range(1, two_deg):
        w_acc = w_acc + basis_ref[k] * wcoef_ref[k]
        b_acc = b_acc + basis_ref[k] * bcoef_ref[k]

    # Plain (M, K) @ (K, N): the weight is already K-major (stationary MXU layout), so
    # no NT transpose.  The depth column of x hits an all-zero weight row and drops out.
    y = jax.lax.dot_general(
        x_ref[...].astype(mxu_dtype), w_acc.astype(mxu_dtype),
        dimension_numbers=(((1,), (0,)), ((), ())),
        preferred_element_type=jnp.float32,
    )
    o_ref[...] = (y + b_acc).astype(o_ref.dtype)


# ------------------------------------------------------------------- one-time param prep
def prepare_gal_linear_params(coeffs, in_features, out_features, deg, out_pad=None):
    """One-time (parameter-init time) re-layout of the Galerkin coefficients.

    Returns:
      wcoef: (2*deg, in_features+1, out_pad) f32 K-major weight coefficients. The row for
             the depth column and the lane padding are zero, so the kernel consumes the
             raw (B, in_features+1) input with no per-call slice/pad copy.
      bcoef: (2*deg, 1, out_pad) f32 bias coefficients.
    """
    if out_pad is None:
        out_pad = _round_up(out_features, 128)
    in1 = in_features + 1

    coeffs = coeffs.astype(jnp.float32)
    cw = coeffs[: in_features * out_features].reshape(out_features, in_features, deg, 2)
    cb = coeffs[in_features * out_features:].reshape(out_features, deg, 2)

    # (2*deg, in, out): first deg planes = cos coefficients, last deg = sin coefficients.
    wcoef = jnp.concatenate([jnp.transpose(cw[..., 0], (2, 1, 0)),
                             jnp.transpose(cw[..., 1], (2, 1, 0))], axis=0)
    wcoef = jnp.pad(wcoef, ((0, 0),
                            (0, in1 - in_features),           # zero row for the depth col
                            (0, out_pad - out_features)))     # lane-dense output padding

    bcoef = jnp.concatenate([jnp.transpose(cb[..., 0], (1, 0)),
                             jnp.transpose(cb[..., 1], (1, 0))], axis=0)[:, None, :]
    bcoef = jnp.pad(bcoef, ((0, 0), (0, 0), (0, out_pad - out_features)))

    return dict(wcoef=wcoef, bcoef=bcoef, deg=deg,
                in_features=in_features, out_features=out_features,
                in1=in1, out_pad=out_pad)


def _vmem_cap_bytes():
    # Generation-aware VMEM cap with headroom (v5e/v6e: 128 MiB, v7x: 64 MiB physical).
    try:
        return int(pltpu.get_tpu_info().vmem_capacity_bytes * 0.85)
    except Exception:
        return 48 << 20            # conservative cross-generation fallback


# ------------------------------------------------------------------------------ forward
def gal_linear_forward(x_full, params, dilation, shift, *,
                       tile_b=1024, mxu_dtype=jnp.float32):
    """x_full: (B, in_features + 1) with the depth variable appended as last column.

    `params` comes from prepare_gal_linear_params (computed once at init time).
    `mxu_dtype=jnp.bfloat16` -> bf16 MXU operands with f32 accumulation (recommended on
    v5e/v6e/v7x when the accuracy budget allows).
    """
    in_f, out_f = params["in_features"], params["out_features"]
    in1, out_pad, deg = params["in1"], params["out_pad"], params["deg"]
    two_deg = 2 * deg
    assert x_full.shape[1] == in1

    # --- tiny scalar prologue: the (2*deg,) Fourier basis (lands in SMEM) ---------------
    s = x_full[-1, -1].astype(jnp.float32)             # depth scalar, BEFORE any row pad
    dil = jnp.asarray(dilation, jnp.float32).reshape(-1)[0]
    shf = jnp.asarray(shift, jnp.float32).reshape(-1)[0]
    n_range = jnp.linspace(0.0, float(deg), deg, dtype=jnp.float32)
    arg = (s * dil + shf) * n_range
    basis = jnp.concatenate([jnp.cos(arg), jnp.sin(arg)])          # (2*deg,)

    # --- batch tiling: balanced tiles, never pad B up to tile_b -------------------------
    B = x_full.shape[0]
    Bp = _round_up(B, 8)                                # sublane alignment only
    tile_cap = max(8, _round_up(tile_b, 8))
    num_tiles = pl.cdiv(Bp, tile_cap)
    TB = _round_up(pl.cdiv(Bp, num_tiles), 8)           # balanced; last tile may be partial
    # x_full is DMA'd directly (no slice/pad copy) unless B needs sublane alignment.
    x_in = x_full if Bp == B else jnp.pad(x_full, ((0, Bp - B), (0, 0)))

    out_dtype = x_full.dtype

    # --- VMEM budget -----------------------------------------------------------------
    f32b = 4
    itemx = jnp.dtype(x_full.dtype).itemsize
    itemo = jnp.dtype(out_dtype).itemsize
    itemm = jnp.dtype(mxu_dtype).itemsize
    in1_sub = _round_up(in1, 8)
    in1_lane = _round_up(in1, 128)
    need = (two_deg * in1_sub * out_pad * f32b          # wcoef, single-buffered resident
            + two_deg * 8 * out_pad * f32b              # bcoef, single-buffered resident
            + 2 * TB * in1_lane * itemx                 # x tile, double-buffered
            + 2 * TB * out_pad * itemo                  # out tile, double-buffered
            + in1_sub * out_pad * (f32b + itemm)        # weight accumulator + MXU cast
            + TB * out_pad * f32b                       # f32 matmul result
            + TB * in1_lane * itemm)                    # x cast for the MXU
    vmem_limit = int(min(max(2 * need, 16 << 20), _vmem_cap_bytes()))

    out_p = pl.pallas_call(
        partial(_gal_linear_kernel, two_deg=two_deg, mxu_dtype=mxu_dtype),
        out_shape=jax.ShapeDtypeStruct((Bp, out_pad), out_dtype),
        grid=(num_tiles,),
        in_specs=[
            pl.BlockSpec(memory_space=pltpu.MemorySpace.SMEM),   # basis scalars
            pl.BlockSpec(memory_space=pltpu.MemorySpace.VMEM),   # wcoef: resident, 1-buffer
            pl.BlockSpec(memory_space=pltpu.MemorySpace.VMEM),   # bcoef: resident, 1-buffer
            pl.BlockSpec((TB, in1), lambda i: (i, 0)),           # x tile (full last dim)
        ],
        out_specs=pl.BlockSpec((TB, out_pad), lambda i: (i, 0)), # lane-dense output tile
        compiler_params=pltpu.CompilerParams(
            # Every grid step is independent (weight reconstructed per step), so the
            # batch axis is "parallel": sharded across both TensorCores on v7x.
            dimension_semantics=("parallel",),
            vmem_limit_bytes=vmem_limit,
        ),
    )(basis, params["wcoef"], params["bcoef"], x_in)

    # TODO(synk): for large layers where wcoef (10x the weight) no longer fits VMEM, add
    # an out_pad grid axis and tile wcoef as (2*deg, in1, out_tile) instead of full residency.
    return out_p[:B, :out_f]


# ---------------------------------------------------------------------------- reference
def gal_linear_reference(x_full, coeffs, dilation, shift, in_features, out_features, deg):
    """Pure-JAX reference mirroring the PyTorch forward (for verification)."""
    s = x_full[-1, -1]
    x = x_full[:, :-1]
    n_range = jnp.linspace(0.0, float(deg), deg)
    arg = (s * dilation[0] + shift[0]) * n_range
    cos_b, sin_b = jnp.cos(arg), jnp.sin(arg)
    w = jnp.sum(cos_b[None, :] * coeffs[:, :, 0] + sin_b[None, :] * coeffs[:, :, 1], axis=1)
    weight = w[: in_features * out_features].reshape(out_features, in_features)
    bias = w[in_features * out_features:].reshape(out_features)
    return x @ weight.T + bias


if __name__ == "__main__":
    in_features, out_features = 16, 32
    deg, n_eig = 5, 2          # Fourier(5)

    key = jax.random.PRNGKey(0)
    k_x, k_c, k_x2, k_x3 = jax.random.split(key, 4)

    # Parameters (deterministic, synthetic). NOTE: reset_parameters() zeros coeffs in the
    # module; we use small random values so the kernel computation is non-trivial.
    coeffs = 0.1 * jax.random.normal(
        k_c, ((in_features + 1) * out_features, deg, n_eig), dtype=jnp.float32)
    dilation = jnp.ones((1,), dtype=jnp.float32)
    shift = jnp.zeros((1,), dtype=jnp.float32)

    # One-time parameter layout (init-time), then the hot forward calls.
    params = prepare_gal_linear_params(coeffs, in_features, out_features, deg)

    # --- primary check: batch=8, f32 MXU path -------------------------------------------
    x_full = jax.random.normal(k_x, (8, in_features + 1), dtype=jnp.float32)
    out = jax.block_until_ready(gal_linear_forward(x_full, params, dilation, shift))
    ref = gal_linear_reference(x_full, coeffs, dilation, shift,
                               in_features, out_features, deg)
    assert out.shape == (8, out_features)
    assert jnp.allclose(out, ref, atol=1e-4, rtol=1e-4)

    # --- multi-tile grid (exercises the "parallel" batch axis) --------------------------
    x_big = jax.random.normal(k_x2, (64, in_features + 1), dtype=jnp.float32)
    out_big = jax.block_until_ready(
        gal_linear_forward(x_big, params, dilation, shift, tile_b=16))
    ref_big = gal_linear_reference(x_big, coeffs, dilation, shift,
                                   in_features, out_features, deg)
    assert jnp.allclose(out_big, ref_big, atol=1e-4, rtol=1e-4)

    # --- unaligned batch (sublane row-pad path) ------------------------------------------
    x_odd = jax.random.normal(k_x3, (20, in_features + 1), dtype=jnp.float32)
    out_odd = jax.block_until_ready(gal_linear_forward(x_odd, params, dilation, shift))
    ref_odd = gal_linear_reference(x_odd, coeffs, dilation, shift,
                                   in_features, out_features, deg)
    assert jnp.allclose(out_odd, ref_odd, atol=1e-4, rtol=1e-4)

    # --- bf16 MXU operands with f32 accumulation (throughput path) ----------------------
    out_bf16 = jax.block_until_ready(
        gal_linear_forward(x_full, params, dilation, shift, mxu_dtype=jnp.bfloat16))
    assert jnp.allclose(out_bf16, ref, atol=1e-1, rtol=1e-1)

    print("KERNEL_OK")
</pallas_src>

<mosaic_0001>
module attributes {stable_mosaic.version = 11 : i64} {
  func.func @_gal_linear_kernel(%arg0: i32, %arg1: memref<10xf32, #tpu.memory_space<smem>>, %arg2: memref<10x17x128xf32, #tpu.memory_space<vmem>>, %arg3: memref<10x1x128xf32, #tpu.memory_space<vmem>>, %arg4: memref<8x17xf32, #tpu.memory_space<vmem>>, %arg5: memref<8x128xf32, #tpu.memory_space<vmem>>) attributes {dimension_semantics = [#tpu.dimension_semantics<parallel>], iteration_bounds = array<i64: 1>, scalar_prefetch = 0 : i64, scratch_operands = 0 : i64, tpu.core_type = #tpu.core_type<tc>, window_params = [{transform_indices = @transform_0, window_bounds = array<i64: 10>}, {pipeline_mode = #tpu.pipeline_mode<synchronous>, transform_indices = @transform_1, window_bounds = array<i64: 10, 17, 128>}, {pipeline_mode = #tpu.pipeline_mode<synchronous>, transform_indices = @transform_2, window_bounds = array<i64: 10, 1, 128>}, {transform_indices = @transform_3, window_bounds = array<i64: 8, 17>}, {transform_indices = @transform_4, window_bounds = array<i64: 8, 128>}]} {
    %c0 = arith.constant 0 : index
    %0 = memref.load %arg1[%c0] : memref<10xf32, #tpu.memory_space<smem>>
    %c0_0 = arith.constant 0 : index
    %c0_1 = arith.constant 0 : index
    %c0_2 = arith.constant 0 : index
    %1 = vector.load %arg2[%c0_0, %c0_1, %c0_2] : memref<10x17x128xf32, #tpu.memory_space<vmem>>, vector<1x17x128xf32>
    %2 = vector.shape_cast %1 : vector<1x17x128xf32> to vector<17x128xf32>
    %3 = vector.broadcast %0 : f32 to vector<17x128xf32>
    %4 = arith.mulf %3, %2 : vector<17x128xf32>
    %c0_3 = arith.constant 0 : index
    %5 = memref.load %arg1[%c0_3] : memref<10xf32, #tpu.memory_space<smem>>
    %c0_4 = arith.constant 0 : index
    %c0_5 = arith.constant 0 : index
    %c0_6 = arith.constant 0 : index
    %6 = vector.load %arg3[%c0_4, %c0_5, %c0_6] : memref<10x1x128xf32, #tpu.memory_space<vmem>>, vector<1x1x128xf32>
    %7 = vector.shape_cast %6 : vector<1x1x128xf32> to vector<1x128xf32>
    %8 = vector.broadcast %5 : f32 to vector<1x128xf32>
    %9 = arith.mulf %8, %7 : vector<1x128xf32>
    %c1 = arith.constant 1 : index
    %10 = memref.load %arg1[%c1] : memref<10xf32, #tpu.memory_space<smem>>
    %c1_7 = arith.constant 1 : index
    %c0_8 = arith.constant 0 : index
    %c0_9 = arith.constant 0 : index
    %11 = vector.load %arg2[%c1_7, %c0_8, %c0_9] : memref<10x17x128xf32, #tpu.memory_space<vmem>>, vector<1x17x128xf32>
    %12 = vector.shape_cast %11 : vector<1x17x128xf32> to vector<17x128xf32>
    %13 = vector.broadcast %10 : f32 to vector<17x128xf32>
    %14 = arith.mulf %13, %12 : vector<17x128xf32>
    %15 = arith.addf %4, %14 : vector<17x128xf32>
    %c1_10 = arith.constant 1 : index
    %16 = memref.load %arg1[%c1_10] : memref<10xf32, #tpu.memory_space<smem>>
    %c1_11 = arith.constant 1 : index
    %c0_12 = arith.constant 0 : index
    %c0_13 = arith.constant 0 : index
    %17 = vector.load %arg3[%c1_11, %c0_12, %c0_13] : memref<10x1x128xf32, #tpu.memory_space<vmem>>, vector<1x1x128xf32>
    %18 = vector.shape_cast %17 : vector<1x1x128xf32> to vector<1x128xf32>
    %19 = vector.broadcast %16 : f32 to vector<1x128xf32>
    %20 = arith.mulf %19, %18 : vector<1x128xf32>
    %21 = arith.addf %9, %20 : vector<1x128xf32>
    %c2 = arith.constant 2 : index
    %22 = memref.load %arg1[%c2] : memref<10xf32, #tpu.memory_space<smem>>
    %c2_14 = arith.constant 2 : index
    %c0_15 = arith.constant 0 : index
    %c0_16 = arith.constant 0 : index
    %23 = vector.load %arg2[%c2_14, %c0_15, %c0_16] : memref<10x17x128xf32, #tpu.memory_space<vmem>>, vector<1x17x128xf32>
    %24 = vector.shape_cast %23 : vector<1x17x128xf32> to vector<17x128xf32>
    %25 = vector.broadcast %22 : f32 to vector<17x128xf32>
    %26 = arith.mulf %25, %24 : vector<17x128xf32>
    %27 = arith.addf %15, %26 : vector<17x128xf32>
    %c2_17 = arith.constant 2 : index
    %28 = memref.load %arg1[%c2_17] : memref<10xf32, #tpu.memory_space<smem>>
    %c2_18 = arith.constant 2 : index
    %c0_19 = arith.constant 0 : index
    %c0_20 = arith.constant 0 : index
    %29 = vector.load %arg3[%c2_18, %c0_19, %c0_20] : memref<10x1x128xf32, #tpu.memory_space<vmem>>, vector<1x1x128xf32>
    %30 = vector.shape_cast %29 : vector<1x1x128xf32> to vector<1x128xf32>
    %31 = vector.broadcast %28 : f32 to vector<1x128xf32>
    %32 = arith.mulf %31, %30 : vector<1x128xf32>
    %33 = arith.addf %21, %32 : vector<1x128xf32>
    %c3 = arith.constant 3 : index
    %34 = memref.load %arg1[%c3] : memref<10xf32, #tpu.memory_space<smem>>
    %c3_21 = arith.constant 3 : index
    %c0_22 = arith.constant 0 : index
    %c0_23 = arith.constant 0 : index
    %35 = vector.load %arg2[%c3_21, %c0_22, %c0_23] : memref<10x17x128xf32, #tpu.memory_space<vmem>>, vector<1x17x128xf32>
    %36 = vector.shape_cast %35 : vector<1x17x128xf32> to vector<17x128xf32>
    %37 = vector.broadcast %34 : f32 to vector<17x128xf32>
    %38 = arith.mulf %37, %36 : vector<17x128xf32>
    %39 = arith.addf %27, %38 : vector<17x128xf32>
    %c3_24 = arith.constant 3 : index
    %40 = memref.load %arg1[%c3_24] : memref<10xf32, #tpu.memory_space<smem>>
    %c3_25 = arith.constant 3 : index
    %c0_26 = arith.constant 0 : index
    %c0_27 = arith.constant 0 : index
    %41 = vector.load %arg3[%c3_25, %c0_26, %c0_27] : memref<10x1x128xf32, #tpu.memory_space<vmem>>, vector<1x1x128xf32>
    %42 = vector.shape_cast %41 : vector<1x1x128xf32> to vector<1x128xf32>
    %43 = vector.broadcast %40 : f32 to vector<1x128xf32>
    %44 = arith.mulf %43, %42 : vector<1x128xf32>
    %45 = arith.addf %33, %44 : vector<1x128xf32>
    %c4 = arith.constant 4 : index
    %46 = memref.load %arg1[%c4] : memref<10xf32, #tpu.memory_space<smem>>
    %c4_28 = arith.constant 4 : index
    %c0_29 = arith.constant 0 : index
    %c0_30 = arith.constant 0 : index
    %47 = vector.load %arg2[%c4_28, %c0_29, %c0_30] : memref<10x17x128xf32, #tpu.memory_space<vmem>>, vector<1x17x128xf32>
    %48 = vector.shape_cast %47 : vector<1x17x128xf32> to vector<17x128xf32>
    %49 = vector.broadcast %46 : f32 to vector<17x128xf32>
    %50 = arith.mulf %49, %48 : vector<17x128xf32>
    %51 = arith.addf %39, %50 : vector<17x128xf32>
    %c4_31 = arith.constant 4 : index
    %52 = memref.load %arg1[%c4_31] : memref<10xf32, #tpu.memory_space<smem>>
    %c4_32 = arith.constant 4 : index
    %c0_33 = arith.constant 0 : index
    %c0_34 = arith.constant 0 : index
    %53 = vector.load %arg3[%c4_32, %c0_33, %c0_34] : memref<10x1x128xf32, #tpu.memory_space<vmem>>, vector<1x1x128xf32>
    %54 = vector.shape_cast %53 : vector<1x1x128xf32> to vector<1x128xf32>
    %55 = vector.broadcast %52 : f32 to vector<1x128xf32>
    %56 = arith.mulf %55, %54 : vector<1x128xf32>
    %57 = arith.addf %45, %56 : vector<1x128xf32>
    %c5 = arith.constant 5 : index
    %58 = memref.load %arg1[%c5] : memref<10xf32, #tpu.memory_space<smem>>
    %c5_35 = arith.constant 5 : index
    %c0_36 = arith.constant 0 : index
    %c0_37 = arith.constant 0 : index
    %59 = vector.load %arg2[%c5_35, %c0_36, %c0_37] : memref<10x17x128xf32, #tpu.memory_space<vmem>>, vector<1x17x128xf32>
    %60 = vector.shape_cast %59 : vector<1x17x128xf32> to vector<17x128xf32>
    %61 = vector.broadcast %58 : f32 to vector<17x128xf32>
    %62 = arith.mulf %61, %60 : vector<17x128xf32>
    %63 = arith.addf %51, %62 : vector<17x128xf32>
    %c5_38 = arith.constant 5 : index
    %64 = memref.load %arg1[%c5_38] : memref<10xf32, #tpu.memory_space<smem>>
    %c5_39 = arith.constant 5 : index
    %c0_40 = arith.constant 0 : index
    %c0_41 = arith.constant 0 : index
    %65 = vector.load %arg3[%c5_39, %c0_40, %c0_41] : memref<10x1x128xf32, #tpu.memory_space<vmem>>, vector<1x1x128xf32>
    %66 = vector.shape_cast %65 : vector<1x1x128xf32> to vector<1x128xf32>
    %67 = vector.broadcast %64 : f32 to vector<1x128xf32>
    %68 = arith.mulf %67, %66 : vector<1x128xf32>
    %69 = arith.addf %57, %68 : vector<1x128xf32>
    %c6 = arith.constant 6 : index
    %70 = memref.load %arg1[%c6] : memref<10xf32, #tpu.memory_space<smem>>
    %c6_42 = arith.constant 6 : index
    %c0_43 = arith.constant 0 : index
    %c0_44 = arith.constant 0 : index
    %71 = vector.load %arg2[%c6_42, %c0_43, %c0_44] : memref<10x17x128xf32, #tpu.memory_space<vmem>>, vector<1x17x128xf32>
    %72 = vector.shape_cast %71 : vector<1x17x128xf32> to vector<17x128xf32>
    %73 = vector.broadcast %70 : f32 to vector<17x128xf32>
    %74 = arith.mulf %73, %72 : vector<17x128xf32>
    %75 = arith.addf %63, %74 : vector<17x128xf32>
    %c6_45 = arith.constant 6 : index
    %76 = memref.load %arg1[%c6_45] : memref<10xf32, #tpu.memory_space<smem>>
    %c6_46 = arith.constant 6 : index
    %c0_47 = arith.constant 0 : index
    %c0_48 = arith.constant 0 : index
    %77 = vector.load %arg3[%c6_46, %c0_47, %c0_48] : memref<10x1x128xf32, #tpu.memory_space<vmem>>, vector<1x1x128xf32>
    %78 = vector.shape_cast %77 : vector<1x1x128xf32> to vector<1x128xf32>
    %79 = vector.broadcast %76 : f32 to vector<1x128xf32>
    %80 = arith.mulf %79, %78 : vector<1x128xf32>
    %81 = arith.addf %69, %80 : vector<1x128xf32>
    %c7 = arith.constant 7 : index
    %82 = memref.load %arg1[%c7] : memref<10xf32, #tpu.memory_space<smem>>
    %c7_49 = arith.constant 7 : index
    %c0_50 = arith.constant 0 : index
    %c0_51 = arith.constant 0 : index
    %83 = vector.load %arg2[%c7_49, %c0_50, %c0_51] : memref<10x17x128xf32, #tpu.memory_space<vmem>>, vector<1x17x128xf32>
    %84 = vector.shape_cast %83 : vector<1x17x128xf32> to vector<17x128xf32>
    %85 = vector.broadcast %82 : f32 to vector<17x128xf32>
    %86 = arith.mulf %85, %84 : vector<17x128xf32>
    %87 = arith.addf %75, %86 : vector<17x128xf32>
    %c7_52 = arith.constant 7 : index
    %88 = memref.load %arg1[%c7_52] : memref<10xf32, #tpu.memory_space<smem>>
    %c7_53 = arith.constant 7 : index
    %c0_54 = arith.constant 0 : index
    %c0_55 = arith.constant 0 : index
    %89 = vector.load %arg3[%c7_53, %c0_54, %c0_55] : memref<10x1x128xf32, #tpu.memory_space<vmem>>, vector<1x1x128xf32>
    %90 = vector.shape_cast %89 : vector<1x1x128xf32> to vector<1x128xf32>
    %91 = vector.broadcast %88 : f32 to vector<1x128xf32>
    %92 = arith.mulf %91, %90 : vector<1x128xf32>
    %93 = arith.addf %81, %92 : vector<1x128xf32>
    %c8 = arith.constant 8 : index
    %94 = memref.load %arg1[%c8] : memref<10xf32, #tpu.memory_space<smem>>
    %c8_56 = arith.constant 8 : index
    %c0_57 = arith.constant 0 : index
    %c0_58 = arith.constant 0 : index
    %95 = vector.load %arg2[%c8_56, %c0_57, %c0_58] : memref<10x17x128xf32, #tpu.memory_space<vmem>>, vector<1x17x128xf32>
    %96 = vector.shape_cast %95 : vector<1x17x128xf32> to vector<17x128xf32>
    %97 = vector.broadcast %94 : f32 to vector<17x128xf32>
    %98 = arith.mulf %97, %96 : vector<17x128xf32>
    %99 = arith.addf %87, %98 : vector<17x128xf32>
    %c8_59 = arith.constant 8 : index
    %100 = memref.load %arg1[%c8_59] : memref<10xf32, #tpu.memory_space<smem>>
    %c8_60 = arith.constant 8 : index
    %c0_61 = arith.constant 0 : index
    %c0_62 = arith.constant 0 : index
    %101 = vector.load %arg3[%c8_60, %c0_61, %c0_62] : memref<10x1x128xf32, #tpu.memory_space<vmem>>, vector<1x1x128xf32>
    %102 = vector.shape_cast %101 : vector<1x1x128xf32> to vector<1x128xf32>
    %103 = vector.broadcast %100 : f32 to vector<1x128xf32>
    %104 = arith.mulf %103, %102 : vector<1x128xf32>
    %105 = arith.addf %93, %104 : vector<1x128xf32>
    %c9 = arith.constant 9 : index
    %106 = memref.load %arg1[%c9] : memref<10xf32, #tpu.memory_space<smem>>
    %c9_63 = arith.constant 9 : index
    %c0_64 = arith.constant 0 : index
    %c0_65 = arith.constant 0 : index
    %107 = vector.load %arg2[%c9_63, %c0_64, %c0_65] : memref<10x17x128xf32, #tpu.memory_space<vmem>>, vector<1x17x128xf32>
    %108 = vector.shape_cast %107 : vector<1x17x128xf32> to vector<17x128xf32>
    %109 = vector.broadcast %106 : f32 to vector<17x128xf32>
    %110 = arith.mulf %109, %108 : vector<17x128xf32>
    %111 = arith.addf %99, %110 : vector<17x128xf32>
    %c9_66 = arith.constant 9 : index
    %112 = memref.load %arg1[%c9_66] : memref<10xf32, #tpu.memory_space<smem>>
    %c9_67 = arith.constant 9 : index
    %c0_68 = arith.constant 0 : index
    %c0_69 = arith.constant 0 : index
    %113 = vector.load %arg3[%c9_67, %c0_68, %c0_69] : memref<10x1x128xf32, #tpu.memory_space<vmem>>, vector<1x1x128xf32>
    %114 = vector.shape_cast %113 : vector<1x1x128xf32> to vector<1x128xf32>
    %115 = vector.broadcast %112 : f32 to vector<1x128xf32>
    %116 = arith.mulf %115, %114 : vector<1x128xf32>
    %117 = arith.addf %105, %116 : vector<1x128xf32>
    %c0_70 = arith.constant 0 : index
    %c0_71 = arith.constant 0 : index
    %118 = vector.load %arg4[%c0_70, %c0_71] : memref<8x17xf32, #tpu.memory_space<vmem>>, vector<8x17xf32>
    %cst = arith.constant dense<0.000000e+00> : vector<8x128xf32>
    %119 = tpu.matmul %118, %111, %cst {dimension_numbers = #tpu.dot_dimension_numbers<[1], [0], [0], [1], [0, 0, 1, 1], [], []>} : vector<8x17xf32>, vector<17x128xf32>, vector<8x128xf32> -> vector<8x128xf32>
    %120 = vector.broadcast %117 : vector<1x128xf32> to vector<8x128xf32>
    %121 = arith.addf %119, %120 : vector<8x128xf32>
    %c0_72 = arith.constant 0 : index
    %c0_73 = arith.constant 0 : index
    %122 = vector.load %arg5[%c0_72, %c0_73] : memref<8x128xf32, #tpu.memory_space<vmem>>, vector<8x128xf32>
    tpu.vector_store %arg5[%c0_72, %c0_73], %121 {strides = array<i32>} : memref<8x128xf32, #tpu.memory_space<vmem>>, vector<8x128xf32>,
    return
  }
  func.func @transform_0(%arg0: i32) -> i32 {
    %c0_i32 = arith.constant 0 : i32
    %c0_i32_0 = arith.constant 0 : i32
    return %c0_i32 : i32
  }
  func.func @transform_1(%arg0: i32) -> (i32, i32, i32) {
    %c0_i32 = arith.constant 0 : i32
    %c0_i32_0 = arith.constant 0 : i32
    %c0_i32_1 = arith.constant 0 : i32
    %c0_i32_2 = arith.constant 0 : i32
    return %c0_i32, %c0_i32_0, %c0_i32_1 : i32, i32, i32
  }
  func.func @transform_2(%arg0: i32) -> (i32, i32, i32) {
    %c0_i32 = arith.constant 0 : i32
    %c0_i32_0 = arith.constant 0 : i32
    %c0_i32_1 = arith.constant 0 : i32
    %c0_i32_2 = arith.constant 0 : i32
    return %c0_i32, %c0_i32_0, %c0_i32_1 : i32, i32, i32
  }
  func.func @transform_3(%arg0: i32) -> (i32, i32) {
    %c0_i32 = arith.constant 0 : i32
    %c0_i32_0 = arith.constant 0 : i32
    return %arg0, %c0_i32 : i32, i32
  }
  func.func @transform_4(%arg0: i32) -> (i32, i32) {
    %c0_i32 = arith.constant 0 : i32
    %c0_i32_0 = arith.constant 0 : i32
    return %arg0, %c0_i32 : i32, i32
  }
}

</mosaic_0001>

<llo_original>
// kernel: tpu_custom_call.1
$region0: #{tpu_custom_call.1}
  #allocation0 [shape = 'u32[]', space=smem, size = 0x4, offset = 0x4, fixed_abs, tag = 'smem constant byte address 0x4 - core index']
  #allocation1 [shape = 'u32[72,128]{1,0:T(1,128)}', space=vmem, size = 0x9000, scoped, tag = 'internal scratch']
  %s0 = inlined_call_operand.hbm [shape: f32[10], index: 0, kind: input, shape index: {}]
  %s1 = inlined_call_operand.hbm [shape: f32[10,17,128], index: 1, kind: input, shape index: {}]
  %s2 = inlined_call_operand.hbm [shape: f32[10,1,128], index: 2, kind: input, shape index: {}]
  %s3 = inlined_call_operand.hbm [shape: f32[8,17], index: 3, kind: input, shape index: {}]
  %s4 = inlined_call_operand.hbm [shape: f32[8,128], index: 4, kind: output, shape index: {}]
  %s5 = sld [smem:[#allocation0]]
  $region42: #{tpu_custom_call.1} parent=0
    _
  %s7 = ssub.s32 1, %s5
  %s8 = scalar_select 0, %s7, %s5
  $region1: #{tpu_custom_call.1} parent=0
    #allocation2 [shape = 'u8[512]{0}', space=smem, size = 0x200, scoped, tag = 'input window, operand 0, single buffered']
    #allocation3 [shape = 's32[1]{0}', space=sflag, size = 0x4, scoped, tag = 'scoped memory for tpu_custom_call.1']
    #allocation4 [shape = 's32[1]{0}', space=sflag, size = 0x4, scoped, tag = 'scoped memory for tpu_custom_call.1']
    #allocation5 [shape = 's32[1]{0}', space=sflag, size = 0x4, scoped, tag = 'scoped memory for tpu_custom_call.1']
    #allocation6 [shape = 'u8[122880]{0}', space=vmem, size = 0x1e000, scoped, tag = 'input window, operand 1, single buffered']
    #allocation7 [shape = 'u8[5120]{0}', space=vmem, size = 0x1400, scoped, tag = 'input window, operand 2, single buffered']
    #allocation8 [shape = 's32[1]{0}', space=sflag, size = 0x4, scoped, tag = 'scoped memory for tpu_custom_call.1']
    #allocation9 [shape = 'u8[4096]{0}', space=vmem, size = 0x1000, scoped, tag = 'input window, operand 3, single buffered']
    #allocation10 [shape = 'u8[4096]{0}', space=vmem, size = 0x1000, scoped, tag = 'output window, operand 0, single buffered']
    %9 = vsyncpa [#allocation5], 0
    %10 = vsyncpa [#allocation3], 0
    %11 = vsyncpa [#allocation8], 0
    %12 = vsyncpa [#allocation4], 0
    // Predicated region
    $region2: #{tpu_custom_call.1} parent=1 // pred_check
      _
    $region3: #{tpu_custom_call.1} parent=1 // pred_check_branch
      %14 = sbr.rel (0) target = $region5
    $region4: #{tpu_custom_call.1} parent=1 // pred_region
      %16 = vsyncadd [#allocation5], 0
      %s18 = sshll.u32 %s0, 4
      %s19 = int_to_ptr.hbm [resolvable:$true] %s18
      %21 = dma.hbm_to_smem %s19, 16, [#allocation2], [#allocation5]
    $region5: #{tpu_custom_call.1} parent=1 // pred_fallthru
      _
    // Predicated region
    $region6: #{tpu_custom_call.1} parent=1 // pred_check
      _
    $region7: #{tpu_custom_call.1} parent=1 // pred_check_branch
      %23 = sbr.rel (0) target = $region9
    $region8: #{tpu_custom_call.1} parent=1 // pred_region
      %25 = vsyncadd [#allocation3], 0
      %s26 = sshll.u32 %s1, 4
      %s27 = int_to_ptr.hbm [resolvable:$true] %s26
      %s28 = sshll.u32 [#allocation6], 4
      %s29 = int_to_ptr.vmem [resolvable:$true] %s28
      %34 = dma.hbm_to_vmem [thread:$0]  %s27, 3840, %s29, [#allocation3], 128, 128, 8
    $region9: #{tpu_custom_call.1} parent=1 // pred_fallthru
      _
    // Predicated region
    $region10: #{tpu_custom_call.1} parent=1 // pred_check
      _
    $region11: #{tpu_custom_call.1} parent=1 // pred_check_branch
      %36 = sbr.rel (0) target = $region13
    $region12: #{tpu_custom_call.1} parent=1 // pred_region
      %38 = vsyncadd [#allocation8], 0
      %s39 = sshll.u32 %s2, 4
      %s40 = int_to_ptr.hbm [resolvable:$true] %s39
      %s41 = sshll.u32 [#allocation7], 4
      %s42 = int_to_ptr.vmem [resolvable:$true] %s41
      %47 = dma.hbm_to_vmem [thread:$0]  %s40, 160, %s42, [#allocation8], 16, 16, 1
    $region13: #{tpu_custom_call.1} parent=1 // pred_fallthru
      _
    // Predicated region
    $region14: #{tpu_custom_call.1} parent=1 // pred_check
      _
    $region15: #{tpu_custom_call.1} parent=1 // pred_check_branch
      %49 = sbr.rel (0) target = $region17
    $region16: #{tpu_custom_call.1} parent=1 // pred_region
      %51 = vsyncadd [#allocation8], 0
      %s53 = sshll.u32 %s3, 4
      %s54 = int_to_ptr.hbm [resolvable:$true] %s53
      %s55 = sshll.u32 [#allocation9], 4
      %s56 = int_to_ptr.vmem [resolvable:$true] %s55
      %58 = dma.hbm_to_vmem [thread:$0]  %s54, 128, %s56, [#allocation8]
    $region17: #{tpu_custom_call.1} parent=1 // pred_fallthru
      _
    // Predicated region
    $region18: #{tpu_custom_call.1} parent=1 // pred_check
      _
    $region19: #{tpu_custom_call.1} parent=1 // pred_check_branch
      %60 = sbr.rel (0) target = $region21
    $region20: #{tpu_custom_call.1} parent=1 // pred_region
      %62 = dma.done [#allocation5], 16
    $region21: #{tpu_custom_call.1} parent=1 // pred_fallthru
      _
    // Predicated region
    $region22: #{tpu_custom_call.1} parent=1 // pred_check
      _
    $region23: #{tpu_custom_call.1} parent=1 // pred_check_branch
      %64 = sbr.rel (0) target = $region25
    $region24: #{tpu_custom_call.1} parent=1 // pred_region
      %66 = dma.done [#allocation3], 3840
    $region25: #{tpu_custom_call.1} parent=1 // pred_fallthru
      _
    // Predicated region
    $region26: #{tpu_custom_call.1} parent=1 // pred_check
      _
    $region27: #{tpu_custom_call.1} parent=1 // pred_check_branch
      %68 = sbr.rel (0) target = $region29
    $region28: #{tpu_custom_call.1} parent=1 // pred_region
      %70 = dma.done [#allocation8], 160
    $region29: #{tpu_custom_call.1} parent=1 // pred_fallthru
      _
    // Predicated region
    $region30: #{tpu_custom_call.1} parent=1 // pred_check
      _
    $region31: #{tpu_custom_call.1} parent=1 // pred_check_branch
      %72 = sbr.rel (0) target = $region33
    $region32: #{tpu_custom_call.1} parent=1 // pred_region
      %74 = dma.done [#allocation8], 128
    $region33: #{tpu_custom_call.1} parent=1 // pred_fallthru
      _
    %75 = sfence
    %s76 = sld [smem:[#allocation2]]
    %v77 = vld [vmem:[#allocation6] sm:$0xff]
    %v78 = vld [vmem:[#allocation6 + $0x8] sm:$0xff]
    %v79 = vld [vmem:[#allocation6 + $0x10] sm:$0x1]
    %v80 = vstv %s76
    %v81 = vmul.f32 %v80, %v77
    %v82 = vmul.f32 %v80, %v78
    %v83 = vmul.f32 %v80, %v79
    %v84 = vld [vmem:[#allocation7] sm:$0x1]
    %v85 = vmul.f32 %v80, %v84
    %s86 = sld [smem:[#allocation2 + $0x1]]
    %s87 = scalar_lea.vmem [#allocation6], 24
    %v88 = vld [vmem:[%s87] sm:$0xff]
    %v89 = vld [vmem:[%s87 + $0x8] sm:$0xff]
    %v90 = vld [vmem:[%s87 + $0x10] sm:$0x1]
    %v91 = vstv %s86
    %v92 = vmul.f32 %v91, %v88
    %v93 = vmul.f32 %v91, %v89
    %v94 = vmul.f32 %v91, %v90
    %v95 = vadd.f32 %v81, %v92
    %v96 = vadd.f32 %v82, %v93
    %v97 = vadd.f32 %v83, %v94
    %s98 = scalar_lea.vmem [#allocation7], 1
    %v99 = vld [vmem:[%s98] sm:$0x1]
    %v100 = vmul.f32 %v91, %v99
    %v101 = vadd.f32 %v85, %v100
    %s102 = sld [smem:[#allocation2 + $0x2]]
    %s103 = scalar_lea.vmem [#allocation6], 48
    %v104 = vld [vmem:[%s103] sm:$0xff]
    %v105 = vld [vmem:[%s103 + $0x8] sm:$0xff]
    %v106 = vld [vmem:[%s103 + $0x10] sm:$0x1]
    %v107 = vstv %s102
    %v108 = vmul.f32 %v107, %v104
    %v109 = vmul.f32 %v107, %v105
    %v110 = vmul.f32 %v107, %v106
    %v111 = vadd.f32 %v95, %v108
    %v112 = vadd.f32 %v96, %v109
    %v113 = vadd.f32 %v97, %v110
    %s114 = scalar_lea.vmem [#allocation7], 2
    %v115 = vld [vmem:[%s114] sm:$0x1]
    %v116 = vmul.f32 %v107, %v115
    %v117 = vadd.f32 %v101, %v116
    %s118 = sld [smem:[#allocation2 + $0x3]]
    %s119 = scalar_lea.vmem [#allocation6], 72
    %v120 = vld [vmem:[%s119] sm:$0xff]
    %v121 = vld [vmem:[%s119 + $0x8] sm:$0xff]
    %v122 = vld [vmem:[%s119 + $0x10] sm:$0x1]
    %v123 = vstv %s118
    %v124 = vmul.f32 %v123, %v120
    %v125 = vmul.f32 %v123, %v121
    %v126 = vmul.f32 %v123, %v122
    %v127 = vadd.f32 %v111, %v124
    %v128 = vadd.f32 %v112, %v125
    %v129 = vadd.f32 %v113, %v126
    %s130 = scalar_lea.vmem [#allocation7], 3
    %v131 = vld [vmem:[%s130] sm:$0x1]
    %v132 = vmul.f32 %v123, %v131
    %v133 = vadd.f32 %v117, %v132
    %s134 = sld [smem:[#allocation2 + $0x4]]
    %s135 = scalar_lea.vmem [#allocation6], 96
    %v136 = vld [vmem:[%s135] sm:$0xff]
    %v137 = vld [vmem:[%s135 + $0x8] sm:$0xff]
    %v138 = vld [vmem:[%s135 + $0x10] sm:$0x1]
    %v139 = vstv %s134
    %v140 = vmul.f32 %v139, %v136
    %v141 = vmul.f32 %v139, %v137
    %v142 = vmul.f32 %v139, %v138
    %v143 = vadd.f32 %v127, %v140
    %v144 = vadd.f32 %v128, %v141
    %v145 = vadd.f32 %v129, %v142
    %s146 = scalar_lea.vmem [#allocation7], 4
    %v147 = vld [vmem:[%s146] sm:$0x1]
    %v148 = vmul.f32 %v139, %v147
    %v149 = vadd.f32 %v133, %v148
    %s150 = sld [smem:[#allocation2 + $0x5]]
    %s151 = scalar_lea.vmem [#allocation6], 120
    %v152 = vld [vmem:[%s151] sm:$0xff]
    %v153 = vld [vmem:[%s151 + $0x8] sm:$0xff]
    %v154 = vld [vmem:[%s151 + $0x10] sm:$0x1]
    %v155 = vstv %s150
    %v156 = vmul.f32 %v155, %v152
    %v157 = vmul.f32 %v155, %v153
    %v158 = vmul.f32 %v155, %v154
    %v159 = vadd.f32 %v143, %v156
    %v160 = vadd.f32 %v144, %v157
    %v161 = vadd.f32 %v145, %v158
    %s162 = scalar_lea.vmem [#allocation7], 5
    %v163 = vld [vmem:[%s162] sm:$0x1]
    %v164 = vmul.f32 %v155, %v163
    %v165 = vadd.f32 %v149, %v164
    %s166 = sld [smem:[#allocation2 + $0x6]]
    %s167 = scalar_lea.vmem [#allocation6], 144
    %v168 = vld [vmem:[%s167] sm:$0xff]
    %v169 = vld [vmem:[%s167 + $0x8] sm:$0xff]
    %v170 = vld [vmem:[%s167 + $0x10] sm:$0x1]
    %v171 = vstv %s166
    %v172 = vmul.f32 %v171, %v168
    %v173 = vmul.f32 %v171, %v169
    %v174 = vmul.f32 %v171, %v170
    %v175 = vadd.f32 %v159, %v172
    %v176 = vadd.f32 %v160, %v173
    %v177 = vadd.f32 %v161, %v174
    %s178 = scalar_lea.vmem [#allocation7], 6
    %v179 = vld [vmem:[%s178] sm:$0x1]
    %v180 = vmul.f32 %v171, %v179
    %v181 = vadd.f32 %v165, %v180
    %s182 = sld [smem:[#allocation2 + $0x7]]
    %s183 = scalar_lea.vmem [#allocation6], 168
    %v184 = vld [vmem:[%s183] sm:$0xff]
    %v185 = vld [vmem:[%s183 + $0x8] sm:$0xff]
    %v186 = vld [vmem:[%s183 + $0x10] sm:$0x1]
    %v187 = vstv %s182
    %v188 = vmul.f32 %v187, %v184
    %v189 = vmul.f32 %v187, %v185
    %v190 = vmul.f32 %v187, %v186
    %v191 = vadd.f32 %v175, %v188
    %v192 = vadd.f32 %v176, %v189
    %v193 = vadd.f32 %v177, %v190
    %s194 = scalar_lea.vmem [#allocation7], 7
    %v195 = vld [vmem:[%s194] sm:$0x1]
    %v196 = vmul.f32 %v187, %v195
    %v197 = vadd.f32 %v181, %v196
    %s198 = sld [smem:[#allocation2 + $0x8]]
    %s199 = scalar_lea.vmem [#allocation6], 192
    %v200 = vld [vmem:[%s199] sm:$0xff]
    %v201 = vld [vmem:[%s199 + $0x8] sm:$0xff]
    %v202 = vld [vmem:[%s199 + $0x10] sm:$0x1]
    %v203 = vstv %s198
    %v204 = vmul.f32 %v203, %v200
    %v205 = vmul.f32 %v203, %v201
    %v206 = vmul.f32 %v203, %v202
    %v207 = vadd.f32 %v191, %v204
    %v208 = vadd.f32 %v192, %v205
    %v209 = vadd.f32 %v193, %v206
    %s210 = scalar_lea.vmem [#allocation7], 8
    %v211 = vld [vmem:[%s210] sm:$0x1]
    %v212 = vmul.f32 %v203, %v211
    %v213 = vadd.f32 %v197, %v212
    %s214 = sld [smem:[#allocation2 + $0x9]]
    %s215 = scalar_lea.vmem [#allocation6], 216
    %v216 = vld [vmem:[%s215] sm:$0xff]
    %v217 = vld [vmem:[%s215 + $0x8] sm:$0xff]
    %v218 = vld [vmem:[%s215 + $0x10] sm:$0x1]
    %v219 = vstv %s214
    %v220 = vmul.f32 %v219, %v216
    %v221 = vmul.f32 %v219, %v217
    %v222 = vmul.f32 %v219, %v218
    %v223 = vadd.f32 %v207, %v220
    %v224 = vadd.f32 %v208, %v221
    %v225 = vadd.f32 %v209, %v222
    %s226 = scalar_lea.vmem [#allocation7], 9
    %v227 = vld [vmem:[%s226] sm:$0x1]
    %v228 = vmul.f32 %v219, %v227
    %v229 = vadd.f32 %v213, %v228
    %v230 = vld [vmem:[#allocation9] sm:$0xff]
    %v232 = vperm.slane %v229, 0
    %vm234 = vcmask 138240
    %v236 = vsel %vm234, %v230, 0
    %vm238 = vcmask 1040384
    %v240 = vsel %vm238, %v225, 0
    %242 = vmatpush.msra.mxu0 0.0
    %243 = vmatpush.msra.mxu0 0.0
    %244 = vmatpush.msra.mxu0 0.0
    %245 = vmatpush.msra.mxu0 0.0
    %246 = vmatpush.msra.mxu0 0.0
    %247 = vmatpush.msra.mxu0 0.0
    %248 = vmatpush.msra.mxu0 0.0
    %249 = vmatpush.msra.mxu0 0.0
    %250 = vmatpush.msra.mxu0 0.0
    %251 = vmatpush.msra.mxu0 0.0
    %252 = vmatpush.msra.mxu0 0.0
    %253 = vmatpush.msra.mxu0 0.0
    %254 = vmatpush.msra.mxu0 0.0
    %255 = vmatpush.msra.mxu0 %v240
    %256 = vmatpush.msra.mxu0 %v224
    %257 = vmatpush.msra.mxu0 %v223
    %258 = vmatmul.f32.gmra.mxu0 %v236
    %v259 = vpop.f32.mrf.mxu0
    %v260 = vadd.f32 %v232, %v259
    %261 = vdwg.mxu0
    %262 = vst [vmem:[#allocation10] sm:$0xff] %v260
    // Predicated region
    $region34: #{tpu_custom_call.1} parent=1 // pred_check
      _
    $region35: #{tpu_custom_call.1} parent=1 // pred_check_branch
      %264 = sbr.rel (0) target = $region37
    $region36: #{tpu_custom_call.1} parent=1 // pred_region
      %266 = vsyncadd [#allocation4], 0
      %s268 = sshll.u32 [#allocation10], 4
      %s269 = int_to_ptr.vmem [resolvable:$true] %s268
      %s270 = sshll.u32 %s4, 4
      %s271 = int_to_ptr.hbm [resolvable:$true] %s270
      %273 = dma.vmem_to_hbm [thread:$0]  %s269, 128, %s271, [#allocation4]
    $region37: #{tpu_custom_call.1} parent=1 // pred_fallthru
      _
    // Predicated region
    $region38: #{tpu_custom_call.1} parent=1 // pred_check
      _
    $region39: #{tpu_custom_call.1} parent=1 // pred_check_branch
      %275 = sbr.rel (0) target = $region41
    $region40: #{tpu_custom_call.1} parent=1 // pred_region
      %277 = dma.done [#allocation4], 128
    $region41: #{tpu_custom_call.1} parent=1 // pred_fallthru
      _
    %278 = vsyncpa [#allocation3], 1
    %279 = vsyncpa [#allocation8], 1
    %280 = vsyncpa [#allocation4], 1
    %281 = vsyncpa [#allocation5], 1

</llo_original>
